<compile_context>
chip_gen: v7x
topology: tpu7x:2x2x1
jax: 0.10.0
libtpu: 0.0.40
codegen_flags: <defaults>
</compile_context>

<pallas_src>
import jax
import jax.numpy as jnp
from jax.experimental import pallas as pl
from jax.experimental.pallas import tpu as pltpu


def _softmax_kernel(x_ref, o_ref):
    # x_ref / o_ref: (rows_tile, C); softmax over the last (lane) axis.
    x = x_ref[...].astype(jnp.float32)
    m = jnp.max(x, axis=-1, keepdims=True)          # XLU cross-lane reduce
    e = jnp.exp(x - m)                               # EUP
    s = jnp.sum(e, axis=-1, keepdims=True)           # XLU cross-lane reduce
    inv = 1.0 / s                                    # exact recip on (rows, 1)
    o_ref[...] = (e * inv).astype(o_ref.dtype)


def _pick_row_tile(num_rows, c, in_dsize, out_dsize,
                   budget_bytes=16 * 1024 * 1024, max_rows_cap=2048):
    # Footprint per row: double-buffered input + double-buffered output
    # + in-kernel f32 temporaries (x_f32, e) ~ 8 bytes/elem.
    bytes_per_row = c * (2 * in_dsize + 2 * out_dsize + 8)
    max_rows = max(1, budget_bytes // max(bytes_per_row, 1))
    tr = int(min(max_rows, max_rows_cap, num_rows))
    if tr < num_rows:
        # Keep sublane (8) alignment for partial-array blocks.
        tr = max(8, (tr // 8) * 8)
    return tr


def pallas_softmax(x, dim=None, inv_head=None):
    """Softmax over `dim` (default last), matching torch.softmax(x, dim)."""
    # TODO(synk): torch's deprecated dim=None behavior infers dim from ndim
    # (0/1/3 -> 0 else 1); vLLM always passes dim, so we default to -1 here.
    if dim is None:
        dim = -1

    ndim = x.ndim
    axis = dim if dim >= 0 else dim + ndim
    assert 0 <= axis < ndim, "invalid softmax dim"

    moved = axis != ndim - 1
    if moved:
        x = jnp.moveaxis(x, axis, -1)

    work_shape = x.shape
    c = work_shape[-1]
    num_rows = 1
    for d in work_shape[:-1]:
        num_rows *= d
    num_rows = max(num_rows, 1)

    x2 = x.reshape(num_rows, c)

    in_dsize = x2.dtype.itemsize
    out_dsize = in_dsize
    tr = _pick_row_tile(num_rows, c, in_dsize, out_dsize)
    # TODO(synk): for extremely long softmax axes (C so large that even 8 rows
    # blow the VMEM budget) an online-softmax split over a k grid axis is
    # needed; not required for attention-scale C.

    num_tiles = pl.cdiv(num_rows, tr)
    rows_padded = num_tiles * tr
    if rows_padded != num_rows:
        # Zero-padded rows produce a finite uniform softmax and are sliced off.
        x2 = jnp.pad(x2, ((0, rows_padded - num_rows), (0, 0)))

    out2 = pl.pallas_call(
        _softmax_kernel,
        out_shape=jax.ShapeDtypeStruct((rows_padded, c), x2.dtype),
        grid=(num_tiles,),
        in_specs=[pl.BlockSpec((tr, c), lambda i: (i, 0))],
        out_specs=pl.BlockSpec((tr, c), lambda i: (i, 0)),
        compiler_params=pltpu.CompilerParams(
            dimension_semantics=("parallel",),
            vmem_limit_bytes=32 * 1024 * 1024,
        ),
    )(x2)

    if rows_padded != num_rows:
        out2 = out2[:num_rows]

    out = out2.reshape(work_shape)
    if moved:
        out = jnp.moveaxis(out, -1, axis)
    return out


if __name__ == "__main__":
    key = jax.random.PRNGKey(0)

    # Attention-style scores: (batch, heads, q_len, kv_len); softmax over kv.
    x = jax.random.normal(key, (2, 4, 16, 128), dtype=jnp.float32)

    out = pallas_softmax(x, dim=-1)
    out = jax.block_until_ready(out)
    ref = jax.nn.softmax(x, axis=-1)
    assert out.shape == ref.shape and out.dtype == ref.dtype
    assert jnp.allclose(out, ref, atol=1e-5, rtol=1e-5)

    # Exercise the non-last-dim path (wrapper moveaxis) as well.
    out2 = jax.block_until_ready(pallas_softmax(x, dim=1))
    ref2 = jax.nn.softmax(x, axis=1)
    assert jnp.allclose(out2, ref2, atol=1e-5, rtol=1e-5)

    # Non-divisible row count (ragged padding path).
    x3 = jax.random.normal(key, (3, 5, 200), dtype=jnp.bfloat16)
    out3 = jax.block_until_ready(pallas_softmax(x3, dim=-1))
    ref3 = jax.nn.softmax(x3.astype(jnp.float32), axis=-1).astype(jnp.bfloat16)
    assert jnp.allclose(out3.astype(jnp.float32), ref3.astype(jnp.float32),
                        atol=2e-2, rtol=2e-2)

    print("KERNEL_OK")
</pallas_src>

<mosaic_0001>
module attributes {stable_mosaic.version = 11 : i64} {
  func.func @_softmax_kernel(%arg0: i32, %arg1: memref<128x128xf32, #tpu.memory_space<vmem>>, %arg2: memref<128x128xf32, #tpu.memory_space<vmem>>) attributes {dimension_semantics = [#tpu.dimension_semantics<parallel>], iteration_bounds = array<i64: 1>, scalar_prefetch = 0 : i64, scratch_operands = 0 : i64, tpu.core_type = #tpu.core_type<tc>, window_params = [{transform_indices = @transform_0, window_bounds = array<i64: 128, 128>}, {transform_indices = @transform_1, window_bounds = array<i64: 128, 128>}]} {
    %c0 = arith.constant 0 : index
    %c0_0 = arith.constant 0 : index
    %0 = vector.load %arg1[%c0, %c0_0] : memref<128x128xf32, #tpu.memory_space<vmem>>, vector<128x128xf32>
    %cst = arith.constant dense<0xFF800000> : vector<128xf32>
    %1 = vector.multi_reduction <maximumf>, %0, %cst [1] : vector<128x128xf32> to vector<128xf32>
    %2 = vector.shape_cast %1 : vector<128xf32> to vector<128x1xf32>
    %3 = vector.broadcast %2 : vector<128x1xf32> to vector<128x128xf32>
    %4 = arith.subf %0, %3 : vector<128x128xf32>
    %5 = math.exp %4 : vector<128x128xf32>
    %cst_1 = arith.constant dense<0.000000e+00> : vector<128xf32>
    %6 = vector.multi_reduction <add>, %5, %cst_1 [1] : vector<128x128xf32> to vector<128xf32>
    %7 = vector.shape_cast %6 : vector<128xf32> to vector<128x1xf32>
    %cst_2 = arith.constant 1.000000e+00 : f32
    %8 = vector.broadcast %cst_2 : f32 to vector<128x1xf32>
    %9 = arith.divf %8, %7 : vector<128x1xf32>
    %10 = vector.broadcast %9 : vector<128x1xf32> to vector<128x128xf32>
    %11 = arith.mulf %5, %10 : vector<128x128xf32>
    %c0_3 = arith.constant 0 : index
    %c0_4 = arith.constant 0 : index
    %12 = vector.load %arg2[%c0_3, %c0_4] : memref<128x128xf32, #tpu.memory_space<vmem>>, vector<128x128xf32>
    tpu.vector_store %arg2[%c0_3, %c0_4], %11 {strides = array<i32>} : memref<128x128xf32, #tpu.memory_space<vmem>>, vector<128x128xf32>,
    return
  }
  func.func @transform_0(%arg0: i32) -> (i32, i32) {
    %c0_i32 = arith.constant 0 : i32
    %c0_i32_0 = arith.constant 0 : i32
    return %arg0, %c0_i32 : i32, i32
  }
  func.func @transform_1(%arg0: i32) -> (i32, i32) {
    %c0_i32 = arith.constant 0 : i32
    %c0_i32_0 = arith.constant 0 : i32
    return %arg0, %c0_i32 : i32, i32
  }
}

</mosaic_0001>

<llo_original>
// kernel: tpu_custom_call.1
$region0: #{tpu_custom_call.1}
  #allocation0 [shape = 'u32[]', space=smem, size = 0x4, offset = 0x4, fixed_abs, tag = 'smem constant byte address 0x4 - core index']
  #allocation1 [shape = 'u32[144,128]{1,0:T(1,128)}', space=vmem, size = 0x12000, scoped, tag = 'internal scratch']
  %s0 = inlined_call_operand.hbm [shape: f32[128,128], index: 0, kind: input, shape index: {}]
  %s1 = inlined_call_operand.hbm [shape: f32[128,128], index: 1, kind: output, shape index: {}]
  %s2 = sld [smem:[#allocation0]]
  $region18: #{tpu_custom_call.1} parent=0
    _
  %s4 = ssub.s32 1, %s2
  %s5 = scalar_select 0, %s4, %s2
  $region1: #{tpu_custom_call.1} parent=0
    #allocation2 [shape = 'u8[65536]{0}', space=vmem, size = 0x10000, scoped, tag = 'input window, operand 0, single buffered']
    #allocation3 [shape = 's32[1]{0}', space=sflag, size = 0x4, scoped, tag = 'scoped memory for tpu_custom_call.1']
    #allocation4 [shape = 's32[1]{0}', space=sflag, size = 0x4, scoped, tag = 'scoped memory for tpu_custom_call.1']
    #allocation5 [shape = 'u8[65536]{0}', space=vmem, size = 0x10000, scoped, tag = 'output window, operand 0, single buffered']
    %6 = vsyncpa [#allocation3], 0
    %7 = vsyncpa [#allocation4], 0
    // Predicated region
    $region2: #{tpu_custom_call.1} parent=1 // pred_check
      _
    $region3: #{tpu_custom_call.1} parent=1 // pred_check_branch
      %9 = sbr.rel (0) target = $region5
    $region4: #{tpu_custom_call.1} parent=1 // pred_region
      %s11 = ssub.s32 2048, 2048
      %12 = vsyncadd [#allocation3], %s11
      %s13 = sshll.u32 [#allocation2], 4
      %s14 = int_to_ptr.vmem [resolvable:$true] %s13
      %19 = dma.hbm_to_vmem [thread:$0]  %s0, 2048, %s14, [#allocation3], 128, 128, 8
    $region5: #{tpu_custom_call.1} parent=1 // pred_fallthru
      _
    // Predicated region
    $region6: #{tpu_custom_call.1} parent=1 // pred_check
      _
    $region7: #{tpu_custom_call.1} parent=1 // pred_check_branch
      %21 = sbr.rel (0) target = $region9
    $region8: #{tpu_custom_call.1} parent=1 // pred_region
      %22 = dma.done [#allocation3], 2048
    $region9: #{tpu_custom_call.1} parent=1 // pred_fallthru
      _
    %v23 = vld [vmem:[#allocation2] sm:$0xff]
    %v24 = vld [vmem:[#allocation2 + $0x8] sm:$0xff]
    %v25 = vld [vmem:[#allocation2 + $0x10] sm:$0xff]
    %v26 = vld [vmem:[#allocation2 + $0x18] sm:$0xff]
    %v27 = vld [vmem:[#allocation2 + $0x20] sm:$0xff]
    %v28 = vld [vmem:[#allocation2 + $0x28] sm:$0xff]
    %v29 = vld [vmem:[#allocation2 + $0x30] sm:$0xff]
    %v30 = vld [vmem:[#allocation2 + $0x38] sm:$0xff]
    %v31 = vld [vmem:[#allocation2 + $0x40] sm:$0xff]
    %v32 = vld [vmem:[#allocation2 + $0x48] sm:$0xff]
    %v33 = vld [vmem:[#allocation2 + $0x50] sm:$0xff]
    %v34 = vld [vmem:[#allocation2 + $0x58] sm:$0xff]
    %v35 = vld [vmem:[#allocation2 + $0x60] sm:$0xff]
    %v36 = vld [vmem:[#allocation2 + $0x68] sm:$0xff]
    %v37 = vld [vmem:[#allocation2 + $0x70] sm:$0xff]
    %v38 = vld [vmem:[#allocation2 + $0x78] sm:$0xff]
    %39 = vmax.xlane.f32.xlu0 %v23
    %v40 = vpop.xlane.xlu0 %39
    %41 = vmax.xlane.f32.xlu0 %v24
    %v42 = vpop.xlane.xlu0 %41
    %43 = vmax.xlane.f32.xlu0 %v25
    %v44 = vpop.xlane.xlu0 %43
    %45 = vmax.xlane.f32.xlu0 %v26
    %v46 = vpop.xlane.xlu0 %45
    %47 = vmax.xlane.f32.xlu0 %v27
    %v48 = vpop.xlane.xlu0 %47
    %49 = vmax.xlane.f32.xlu0 %v28
    %v50 = vpop.xlane.xlu0 %49
    %51 = vmax.xlane.f32.xlu0 %v29
    %v52 = vpop.xlane.xlu0 %51
    %53 = vmax.xlane.f32.xlu0 %v30
    %v54 = vpop.xlane.xlu0 %53
    %55 = vmax.xlane.f32.xlu0 %v31
    %v56 = vpop.xlane.xlu0 %55
    %57 = vmax.xlane.f32.xlu0 %v32
    %v58 = vpop.xlane.xlu0 %57
    %59 = vmax.xlane.f32.xlu0 %v33
    %v60 = vpop.xlane.xlu0 %59
    %61 = vmax.xlane.f32.xlu0 %v34
    %v62 = vpop.xlane.xlu0 %61
    %63 = vmax.xlane.f32.xlu0 %v35
    %v64 = vpop.xlane.xlu0 %63
    %65 = vmax.xlane.f32.xlu0 %v36
    %v66 = vpop.xlane.xlu0 %65
    %67 = vmax.xlane.f32.xlu0 %v37
    %v68 = vpop.xlane.xlu0 %67
    %69 = vmax.xlane.f32.xlu0 %v38
    %v70 = vpop.xlane.xlu0 %69
    %v71 = vsub.f32 %v23, %v40
    %v72 = vsub.f32 %v24, %v42
    %v73 = vsub.f32 %v25, %v44
    %v74 = vsub.f32 %v26, %v46
    %v75 = vsub.f32 %v27, %v48
    %v76 = vsub.f32 %v28, %v50
    %v77 = vsub.f32 %v29, %v52
    %v78 = vsub.f32 %v30, %v54
    %v79 = vsub.f32 %v31, %v56
    %v80 = vsub.f32 %v32, %v58
    %v81 = vsub.f32 %v33, %v60
    %v82 = vsub.f32 %v34, %v62
    %v83 = vsub.f32 %v35, %v64
    %v84 = vsub.f32 %v36, %v66
    %v85 = vsub.f32 %v37, %v68
    %v86 = vsub.f32 %v38, %v70
    %v87 = vmul.f32 %v71, 1.442695
    %v88 = vpow.pop %v87
    %v89 = vmul.f32 %v72, 1.442695
    %v90 = vpow.pop %v89
    %v91 = vmul.f32 %v73, 1.442695
    %v92 = vpow.pop %v91
    %v93 = vmul.f32 %v74, 1.442695
    %v94 = vpow.pop %v93
    %v95 = vmul.f32 %v75, 1.442695
    %v96 = vpow.pop %v95
    %v97 = vmul.f32 %v76, 1.442695
    %v98 = vpow.pop %v97
    %v99 = vmul.f32 %v77, 1.442695
    %v100 = vpow.pop %v99
    %v101 = vmul.f32 %v78, 1.442695
    %v102 = vpow.pop %v101
    %v103 = vmul.f32 %v79, 1.442695
    %v104 = vpow.pop %v103
    %v105 = vmul.f32 %v80, 1.442695
    %v106 = vpow.pop %v105
    %v107 = vmul.f32 %v81, 1.442695
    %v108 = vpow.pop %v107
    %v109 = vmul.f32 %v82, 1.442695
    %v110 = vpow.pop %v109
    %v111 = vmul.f32 %v83, 1.442695
    %v112 = vpow.pop %v111
    %v113 = vmul.f32 %v84, 1.442695
    %v114 = vpow.pop %v113
    %v115 = vmul.f32 %v85, 1.442695
    %v116 = vpow.pop %v115
    %v117 = vmul.f32 %v86, 1.442695
    %v118 = vpow.pop %v117
    %119 = vadd.xlane.f32.xlu0 %v88
    %v120 = vpop.xlane.xlu0 %119
    %121 = vadd.xlane.f32.xlu0 %v90
    %v122 = vpop.xlane.xlu0 %121
    %123 = vadd.xlane.f32.xlu0 %v92
    %v124 = vpop.xlane.xlu0 %123
    %125 = vadd.xlane.f32.xlu0 %v94
    %v126 = vpop.xlane.xlu0 %125
    %127 = vadd.xlane.f32.xlu0 %v96
    %v128 = vpop.xlane.xlu0 %127
    %129 = vadd.xlane.f32.xlu0 %v98
    %v130 = vpop.xlane.xlu0 %129
    %131 = vadd.xlane.f32.xlu0 %v100
    %v132 = vpop.xlane.xlu0 %131
    %133 = vadd.xlane.f32.xlu0 %v102
    %v134 = vpop.xlane.xlu0 %133
    %135 = vadd.xlane.f32.xlu0 %v104
    %v136 = vpop.xlane.xlu0 %135
    %137 = vadd.xlane.f32.xlu0 %v106
    %v138 = vpop.xlane.xlu0 %137
    %139 = vadd.xlane.f32.xlu0 %v108
    %v140 = vpop.xlane.xlu0 %139
    %141 = vadd.xlane.f32.xlu0 %v110
    %v142 = vpop.xlane.xlu0 %141
    %143 = vadd.xlane.f32.xlu0 %v112
    %v144 = vpop.xlane.xlu0 %143
    %145 = vadd.xlane.f32.xlu0 %v114
    %v146 = vpop.xlane.xlu0 %145
    %147 = vadd.xlane.f32.xlu0 %v116
    %v148 = vpop.xlane.xlu0 %147
    %149 = vadd.xlane.f32.xlu0 %v118
    %v150 = vpop.xlane.xlu0 %149
    %v151 = vrcp.pop %v120
    %v152 = vmul.f32 1.0, %v151
    %v153 = vrcp.pop %v122
    %v154 = vmul.f32 1.0, %v153
    %v155 = vrcp.pop %v124
    %v156 = vmul.f32 1.0, %v155
    %v157 = vrcp.pop %v126
    %v158 = vmul.f32 1.0, %v157
    %v159 = vrcp.pop %v128
    %v160 = vmul.f32 1.0, %v159
    %v161 = vrcp.pop %v130
    %v162 = vmul.f32 1.0, %v161
    %v163 = vrcp.pop %v132
    %v164 = vmul.f32 1.0, %v163
    %v165 = vrcp.pop %v134
    %v166 = vmul.f32 1.0, %v165
    %v167 = vrcp.pop %v136
    %v168 = vmul.f32 1.0, %v167
    %v169 = vrcp.pop %v138
    %v170 = vmul.f32 1.0, %v169
    %v171 = vrcp.pop %v140
    %v172 = vmul.f32 1.0, %v171
    %v173 = vrcp.pop %v142
    %v174 = vmul.f32 1.0, %v173
    %v175 = vrcp.pop %v144
    %v176 = vmul.f32 1.0, %v175
    %v177 = vrcp.pop %v146
    %v178 = vmul.f32 1.0, %v177
    %v179 = vrcp.pop %v148
    %v180 = vmul.f32 1.0, %v179
    %v181 = vrcp.pop %v150
    %v182 = vmul.f32 1.0, %v181
    %v183 = vmul.f32 %v88, %v152
    %v184 = vmul.f32 %v90, %v154
    %v185 = vmul.f32 %v92, %v156
    %v186 = vmul.f32 %v94, %v158
    %v187 = vmul.f32 %v96, %v160
    %v188 = vmul.f32 %v98, %v162
    %v189 = vmul.f32 %v100, %v164
    %v190 = vmul.f32 %v102, %v166
    %v191 = vmul.f32 %v104, %v168
    %v192 = vmul.f32 %v106, %v170
    %v193 = vmul.f32 %v108, %v172
    %v194 = vmul.f32 %v110, %v174
    %v195 = vmul.f32 %v112, %v176
    %v196 = vmul.f32 %v114, %v178
    %v197 = vmul.f32 %v116, %v180
    %v198 = vmul.f32 %v118, %v182
    %199 = vst [vmem:[#allocation5] sm:$0xff] %v183
    %200 = vst [vmem:[#allocation5 + $0x8] sm:$0xff] %v184
    %201 = vst [vmem:[#allocation5 + $0x10] sm:$0xff] %v185
    %202 = vst [vmem:[#allocation5 + $0x18] sm:$0xff] %v186
    %203 = vst [vmem:[#allocation5 + $0x20] sm:$0xff] %v187
    %204 = vst [vmem:[#allocation5 + $0x28] sm:$0xff] %v188
    %205 = vst [vmem:[#allocation5 + $0x30] sm:$0xff] %v189
    %206 = vst [vmem:[#allocation5 + $0x38] sm:$0xff] %v190
    %207 = vst [vmem:[#allocation5 + $0x40] sm:$0xff] %v191
    %208 = vst [vmem:[#allocation5 + $0x48] sm:$0xff] %v192
    %209 = vst [vmem:[#allocation5 + $0x50] sm:$0xff] %v193
    %210 = vst [vmem:[#allocation5 + $0x58] sm:$0xff] %v194
    %211 = vst [vmem:[#allocation5 + $0x60] sm:$0xff] %v195
    %212 = vst [vmem:[#allocation5 + $0x68] sm:$0xff] %v196
    %213 = vst [vmem:[#allocation5 + $0x70] sm:$0xff] %v197
    %214 = vst [vmem:[#allocation5 + $0x78] sm:$0xff] %v198
    // Predicated region
    $region10: #{tpu_custom_call.1} parent=1 // pred_check
      _
    $region11: #{tpu_custom_call.1} parent=1 // pred_check_branch
      %216 = sbr.rel (0) target = $region13
    $region12: #{tpu_custom_call.1} parent=1 // pred_region
      %s218 = ssub.s32 2048, 2048
      %219 = vsyncadd [#allocation4], %s218
      %s220 = sshll.u32 [#allocation5], 4
      %s221 = int_to_ptr.vmem [resolvable:$true] %s220
      %226 = dma.vmem_to_hbm [thread:$0]  %s221, 2048, %s1, [#allocation4], 128, 128, 8
    $region13: #{tpu_custom_call.1} parent=1 // pred_fallthru
      _
    // Predicated region
    $region14: #{tpu_custom_call.1} parent=1 // pred_check
      _
    $region15: #{tpu_custom_call.1} parent=1 // pred_check_branch
      %228 = sbr.rel (0) target = $region17
    $region16: #{tpu_custom_call.1} parent=1 // pred_region
      %229 = dma.done [#allocation4], 2048
    $region17: #{tpu_custom_call.1} parent=1 // pred_fallthru
      _
    %230 = vsyncpa [#allocation3], 1
    %231 = vsyncpa [#allocation4], 1

</llo_original>
